<compile_context>
chip_gen: v7x
topology: tpu7x:2x2x1
jax: 0.10.0
libtpu: 0.0.40
codegen_flags: <defaults>
</compile_context>

<pallas_src>
import functools

import jax
import jax.numpy as jnp
from jax import lax
from jax.experimental import pallas as pl
from jax.experimental.pallas import tpu as pltpu

_LANE = 128
_ACC_ROWS = 8   # one f32 vreg of sublanes


def _row_align(dtype):
    # Minimum sublane tiling: 8 rows for 4-byte, 16 for 2-byte, 32 for 1-byte dtypes.
    return {4: 8, 2: 16, 1: 32}.get(jnp.dtype(dtype).itemsize, 8)


def _pick_max_tile_rows(itemsize):
    """Largest block rows so that 2 inputs x 2 pipeline buffers fit scoped VMEM."""
    budget = 8 << 20            # v5e-safe (16 MiB default scoped VMEM)
    try:
        kind = jax.devices()[0].device_kind.lower()
        if "v6" in kind or "v7" in kind:
            budget = 16 << 20   # 32 MiB default scoped VMEM -> bigger blocks
    except Exception:
        pass
    rows = budget // (4 * _LANE * itemsize)   # 2 inputs x 2 pipeline buffers
    return max(_ACC_ROWS, (rows // _ACC_ROWS) * _ACC_ROWS)


def _sq_diff_sum_kernel(y_ref, d_ref, o_ref, *, tile_m, chunks, rows_valid, need_mask):
    """Accumulate sum((y - d)^2) for this part into its resident (8, 128) output block."""
    p = pl.program_id(0)
    c = pl.program_id(1)

    @pl.when(c == 0)
    def _():
        o_ref[...] = jnp.zeros_like(o_ref)

    diff = y_ref[...].astype(jnp.float32) - d_ref[...].astype(jnp.float32)
    sq = diff * diff
    if need_mask:
        # Zero rows past the end of the data: the partial last block, and any
        # grid step whose logical block lies entirely beyond the data (its read
        # is clamped to a valid block by the index_map, contribution masked here).
        block = p * chunks + c   # logical (unclamped) block index
        row = lax.broadcasted_iota(jnp.int32, (tile_m, 1), 0) + block * tile_m
        sq = jnp.where(row < rows_valid, sq, 0.0)
    # Fold the (tile_m, 128) block into one vreg-shaped partial sum (VALU-only adds).
    o_ref[...] += jnp.sum(sq.reshape(-1, _ACC_ROWS, _LANE), axis=0)


def _mse_sum_pallas(y, d):
    """sum((y - d)**2) over all elements, f32, via the Pallas reduction kernel."""
    n = y.size
    y_flat = jnp.ravel(y)   # contiguous -> layout-preserving, no copy
    d_flat = jnp.ravel(d)

    rows = n // _LANE
    rem = n - rows * _LANE
    align = max(_row_align(y.dtype), _row_align(d.dtype), _ACC_ROWS)

    if rows < align:
        # Too small for a lane/sublane-aligned block; plain JAX.
        return jnp.sum((y_flat.astype(jnp.float32) - d_flat.astype(jnp.float32)) ** 2)

    tail = jnp.float32(0.0)
    if rem:
        # Sub-lane-width remainder: tiny, handled in plain JAX (avoids padding
        # the whole flat array just to make it reshapeable to (rows, 128)).
        yt = y_flat[rows * _LANE:].astype(jnp.float32)
        dt = d_flat[rows * _LANE:].astype(jnp.float32)
        tail = jnp.sum((yt - dt) ** 2)
        # TODO(synk): when n % 128 != 0 this prefix slice still costs one XLA copy;
        # a pl.ANY + manual-DMA kernel could stream the unsliced array instead.
        y_flat = y_flat[: rows * _LANE]
        d_flat = d_flat[: rows * _LANE]

    y2 = y_flat.reshape(rows, _LANE)   # free bitcast
    d2 = d_flat.reshape(rows, _LANE)

    itemsize = max(jnp.dtype(y.dtype).itemsize, jnp.dtype(d.dtype).itemsize)
    tile_m = min(_pick_max_tile_rows(itemsize), (rows // align) * align)
    num_blocks = pl.cdiv(rows, tile_m)

    # Leading "parallel" axis: lets Mosaic shard the reduction across the 2
    # TensorCores on multi-TC chips (v7x); harmless serial loop on v5e/v6e.
    num_parts = 2 if num_blocks >= 2 else 1
    chunks = pl.cdiv(num_blocks, num_parts)
    grid_blocks = num_parts * chunks          # may exceed num_blocks by 1
    last_block = num_blocks - 1
    need_mask = (rows % tile_m != 0) or (grid_blocks != num_blocks)

    if grid_blocks != num_blocks:
        # Clamp reads of the over-run grid step to a valid block; the in-kernel
        # mask (based on the unclamped logical block index) zeroes its contribution.
        in_map = lambda p, c: (jnp.minimum(p * chunks + c, last_block), 0)
    else:
        in_map = lambda p, c: (p * chunks + c, 0)

    kernel = functools.partial(
        _sq_diff_sum_kernel,
        tile_m=tile_m, chunks=chunks, rows_valid=rows, need_mask=need_mask,
    )

    partials = pl.pallas_call(
        kernel,
        out_shape=jax.ShapeDtypeStruct((num_parts * _ACC_ROWS, _LANE), jnp.float32),
        grid_spec=pltpu.PrefetchScalarGridSpec(
            num_scalar_prefetch=0,
            grid=(num_parts, chunks),
            in_specs=[
                pl.BlockSpec((tile_m, _LANE), in_map),
                pl.BlockSpec((tile_m, _LANE), in_map),
            ],
            out_specs=pl.BlockSpec((_ACC_ROWS, _LANE), lambda p, c: (p, 0)),
        ),
        # TODO(synk): on v7x verify "parallel" shards the leading axis across both
        # TensorCores; otherwise switch it to pltpu.CORE_PARALLEL.
        compiler_params=pltpu.CompilerParams(
            dimension_semantics=("parallel", "arbitrary"),
        ),
    )(y2, d2)

    return jnp.sum(partials) + tail


def bce_loss(y, d, *, use_pallas=None):
    """Pallas implementation of the reference BCELoss.forward.

    NOTE: despite the name (kept to match the PyTorch module), the reference
    forward computes mean((y - d)**2), i.e. MSE, and so does this.
    """
    assert y.shape == d.shape, "y and d must have the same shape"
    n = y.size
    if n == 0:
        return jnp.float32(0.0)
    itemsize = max(jnp.dtype(y.dtype).itemsize, jnp.dtype(d.dtype).itemsize)
    if use_pallas is None:
        # Tiny inputs: kernel launch / grid setup dominates; XLA's fused reduce wins.
        use_pallas = n * itemsize >= (1 << 20)
    if not use_pallas:
        return jnp.mean((y.astype(jnp.float32) - d.astype(jnp.float32)) ** 2)
    return _mse_sum_pallas(y, d) / jnp.float32(n)


if __name__ == "__main__":
    key = jax.random.PRNGKey(0)
    ky, kd, ky2, kd2 = jax.random.split(key, 4)

    # Small shape consistent with an autoencoder output vs. target (NCHW).
    y = jax.random.uniform(ky, (2, 4, 16, 16), dtype=jnp.float32)
    d = jax.random.uniform(kd, (2, 4, 16, 16), dtype=jnp.float32)
    loss = jax.block_until_ready(bce_loss(y, d, use_pallas=True))
    ref = jnp.mean((y - d) ** 2)
    assert jnp.allclose(loss, ref, rtol=1e-5, atol=1e-6), (loss, ref)

    # Ragged shape: exercises the in-kernel partial-block row mask, the 2-part
    # grid split, and the sub-128-element tail handled in the wrapper.
    y2 = jax.random.uniform(ky2, (2, 3, 37, 129), dtype=jnp.float32)
    d2 = jax.random.uniform(kd2, (2, 3, 37, 129), dtype=jnp.float32)
    loss2 = jax.block_until_ready(bce_loss(y2, d2, use_pallas=True))
    ref2 = jnp.mean((y2 - d2) ** 2)
    assert jnp.allclose(loss2, ref2, rtol=1e-5, atol=1e-6), (loss2, ref2)

    print("KERNEL_OK")
</pallas_src>

<mosaic_0001>
module attributes {stable_mosaic.version = 11 : i64} {
  func.func @_sq_diff_sum_kernel(%arg0: i32, %arg1: i32, %arg2: memref<16x128xf32, #tpu.memory_space<vmem>>, %arg3: memref<16x128xf32, #tpu.memory_space<vmem>>, %arg4: memref<8x128xf32, #tpu.memory_space<vmem>>) attributes {dimension_semantics = [#tpu.dimension_semantics<parallel>, #tpu.dimension_semantics<arbitrary>], iteration_bounds = array<i64: 1, 1>, scalar_prefetch = 0 : i64, scratch_operands = 0 : i64, tpu.core_type = #tpu.core_type<tc>, window_params = [{transform_indices = @transform_0, window_bounds = array<i64: 16, 128>}, {transform_indices = @transform_1, window_bounds = array<i64: 16, 128>}, {transform_indices = @transform_2, window_bounds = array<i64: 8, 128>}]} {
    %c0_i32 = arith.constant 0 : i32
    %0 = arith.cmpi eq, %arg1, %c0_i32 : i32
    %1 = arith.extui %0 : i1 to i32
    %c0_i32_0 = arith.constant 0 : i32
    %2 = arith.cmpi ne, %1, %c0_i32_0 : i32
    scf.if %2 {
      %cst_8 = arith.constant 0.000000e+00 : f32
      %12 = vector.broadcast %cst_8 : f32 to vector<8x128xf32>
      %c0_9 = arith.constant 0 : index
      %c0_10 = arith.constant 0 : index
      %13 = vector.load %arg4[%c0_9, %c0_10] : memref<8x128xf32, #tpu.memory_space<vmem>>, vector<8x128xf32>
      tpu.vector_store %arg4[%c0_9, %c0_10], %12 {strides = array<i32>} : memref<8x128xf32, #tpu.memory_space<vmem>>, vector<8x128xf32>,
    } else {
    }
    %c0 = arith.constant 0 : index
    %c0_1 = arith.constant 0 : index
    %3 = vector.load %arg2[%c0, %c0_1] : memref<16x128xf32, #tpu.memory_space<vmem>>, vector<16x128xf32>
    %c0_2 = arith.constant 0 : index
    %c0_3 = arith.constant 0 : index
    %4 = vector.load %arg3[%c0_2, %c0_3] : memref<16x128xf32, #tpu.memory_space<vmem>>, vector<16x128xf32>
    %5 = arith.subf %3, %4 : vector<16x128xf32>
    %6 = arith.mulf %5, %5 : vector<16x128xf32>
    %c0_4 = arith.constant 0 : index
    %c0_5 = arith.constant 0 : index
    %7 = vector.load %arg4[%c0_4, %c0_5] : memref<8x128xf32, #tpu.memory_space<vmem>>, vector<8x128xf32>
    %8 = vector.shape_cast %6 : vector<16x128xf32> to vector<2x8x128xf32>
    %cst = arith.constant dense<0.000000e+00> : vector<8x128xf32>
    %9 = vector.multi_reduction <add>, %8, %cst [0] : vector<2x8x128xf32> to vector<8x128xf32>
    %10 = arith.addf %7, %9 : vector<8x128xf32>
    %c0_6 = arith.constant 0 : index
    %c0_7 = arith.constant 0 : index
    %11 = vector.load %arg4[%c0_6, %c0_7] : memref<8x128xf32, #tpu.memory_space<vmem>>, vector<8x128xf32>
    tpu.vector_store %arg4[%c0_6, %c0_7], %10 {strides = array<i32>} : memref<8x128xf32, #tpu.memory_space<vmem>>, vector<8x128xf32>,
    return
  }
  func.func @transform_0(%arg0: i32, %arg1: i32) -> (i32, i32) {
    %c1_i32 = arith.constant 1 : i32
    %0 = arith.muli %arg0, %c1_i32 : i32
    %1 = arith.addi %0, %arg1 : i32
    %c0_i32 = arith.constant 0 : i32
    %c0_i32_0 = arith.constant 0 : i32
    return %1, %c0_i32 : i32, i32
  }
  func.func @transform_1(%arg0: i32, %arg1: i32) -> (i32, i32) {
    %c1_i32 = arith.constant 1 : i32
    %0 = arith.muli %arg0, %c1_i32 : i32
    %1 = arith.addi %0, %arg1 : i32
    %c0_i32 = arith.constant 0 : i32
    %c0_i32_0 = arith.constant 0 : i32
    return %1, %c0_i32 : i32, i32
  }
  func.func @transform_2(%arg0: i32, %arg1: i32) -> (i32, i32) {
    %c0_i32 = arith.constant 0 : i32
    %c0_i32_0 = arith.constant 0 : i32
    return %arg0, %c0_i32 : i32, i32
  }
}

</mosaic_0001>

<llo_original>
// kernel: tpu_custom_call.1
$region0: #{tpu_custom_call.1}
  #allocation0 [shape = 'u32[]', space=smem, size = 0x4, offset = 0x4, fixed_abs, tag = 'smem constant byte address 0x4 - core index']
  #allocation1 [shape = 'u32[144,128]{1,0:T(1,128)}', space=vmem, size = 0x12000, scoped, tag = 'internal scratch']
  %s0 = inlined_call_operand.hbm [shape: f32[16,128], index: 0, kind: input, shape index: {}]
  %s1 = inlined_call_operand.hbm [shape: f32[16,128], index: 1, kind: input, shape index: {}]
  %s2 = inlined_call_operand.hbm [shape: f32[8,128], index: 2, kind: output, shape index: {}]
  %s3 = sld [smem:[#allocation0]]
  $region30: #{tpu_custom_call.1} parent=0
    _
  %s5 = ssub.s32 1, %s3
  %s6 = scalar_select 0, %s5, %s3
  $region1: #{tpu_custom_call.1} parent=0
    #allocation2 [shape = 'u8[8192]{0}', space=vmem, size = 0x2000, scoped, tag = 'input window, operand 0, single buffered']
    #allocation3 [shape = 's32[1]{0}', space=sflag, size = 0x4, scoped, tag = 'scoped memory for tpu_custom_call.1']
    #allocation4 [shape = 's32[1]{0}', space=sflag, size = 0x4, scoped, tag = 'scoped memory for tpu_custom_call.1']
    #allocation5 [shape = 'u8[8192]{0}', space=vmem, size = 0x2000, scoped, tag = 'input window, operand 1, single buffered']
    #allocation6 [shape = 's32[1]{0}', space=sflag, size = 0x4, scoped, tag = 'scoped memory for tpu_custom_call.1']
    #allocation7 [shape = 'u8[4096]{0}', space=vmem, size = 0x1000, scoped, tag = 'output window, operand 0, single buffered']
    %7 = vsyncpa [#allocation3], 0
    %8 = vsyncpa [#allocation6], 0
    %9 = vsyncpa [#allocation4], 0
    // Predicated region
    $region2: #{tpu_custom_call.1} parent=1 // pred_check
      _
    $region3: #{tpu_custom_call.1} parent=1 // pred_check_branch
      %11 = sbr.rel (0) target = $region5
    $region4: #{tpu_custom_call.1} parent=1 // pred_region
      %s12 = sadd.s32 0, 0
      %s13 = smul.u32 2, %s12
      %s15 = ssub.s32 256, 256
      %16 = vsyncadd [#allocation3], %s15
      %s17 = smul.addr %s13, 128
      %s18 = scalar_lea.hbm %s0, %s17
      %s19 = sshll.u32 [#allocation2], 4
      %s20 = int_to_ptr.vmem [resolvable:$true] %s19
      %25 = dma.hbm_to_vmem [thread:$0]  %s18, 256, %s20, [#allocation3], 128, 128, 8
    $region5: #{tpu_custom_call.1} parent=1 // pred_fallthru
      _
    // Predicated region
    $region6: #{tpu_custom_call.1} parent=1 // pred_check
      _
    $region7: #{tpu_custom_call.1} parent=1 // pred_check_branch
      %27 = sbr.rel (0) target = $region9
    $region8: #{tpu_custom_call.1} parent=1 // pred_region
      %s28 = sadd.s32 0, 0
      %s29 = smul.u32 2, %s28
      %s31 = ssub.s32 256, 256
      %32 = vsyncadd [#allocation6], %s31
      %s33 = smul.addr %s29, 128
      %s34 = scalar_lea.hbm %s1, %s33
      %s35 = sshll.u32 [#allocation5], 4
      %s36 = int_to_ptr.vmem [resolvable:$true] %s35
      %41 = dma.hbm_to_vmem [thread:$0]  %s34, 256, %s36, [#allocation6], 128, 128, 8
    $region9: #{tpu_custom_call.1} parent=1 // pred_fallthru
      _
    // Predicated region
    $region10: #{tpu_custom_call.1} parent=1 // pred_check
      _
    $region11: #{tpu_custom_call.1} parent=1 // pred_check_branch
      %43 = sbr.rel (0) target = $region13
    $region12: #{tpu_custom_call.1} parent=1 // pred_region
      %44 = dma.done [#allocation3], 256
    $region13: #{tpu_custom_call.1} parent=1 // pred_fallthru
      _
    // Predicated region
    $region14: #{tpu_custom_call.1} parent=1 // pred_check
      _
    $region15: #{tpu_custom_call.1} parent=1 // pred_check_branch
      %46 = sbr.rel (0) target = $region17
    $region16: #{tpu_custom_call.1} parent=1 // pred_region
      %47 = dma.done [#allocation6], 256
    $region17: #{tpu_custom_call.1} parent=1 // pred_fallthru
      _
    %s48 = sadd.s32 0, 0
    %s49 = smul.u32 2, %s48
    %s50 = sadd.s32 0, 0
    %s51 = smul.u32 2, %s50
    %p52 = scmp.eq.s32.totalorder 0, 0
    // Predicated region
    $region18: #{tpu_custom_call.1} parent=1 // pred_check
      %p53 = pneg %p52
    $region19: #{tpu_custom_call.1} parent=1 // pred_check_branch
      %55 = sbr.rel (%p53) target = $region21
    $region20: #{tpu_custom_call.1} parent=1 // pred_region
      %56 = vst [vmem:[#allocation7] sm:$0xff] 0.0
    $region21: #{tpu_custom_call.1} parent=1 // pred_fallthru
      _
    %v57 = vld [vmem:[#allocation2] sm:$0xff]
    %v58 = vld [vmem:[#allocation2 + $0x8] sm:$0xff]
    %v59 = vld [vmem:[#allocation5] sm:$0xff]
    %v60 = vld [vmem:[#allocation5 + $0x8] sm:$0xff]
    %v61 = vsub.f32 %v57, %v59
    %v62 = vsub.f32 %v58, %v60
    %v63 = vmul.f32 %v61, %v61
    %v64 = vmul.f32 %v62, %v62
    %v65 = vld [vmem:[#allocation7] sm:$0xff]
    %v66 = vadd.f32 %v63, %v64
    %v67 = vadd.f32 %v65, %v66
    %68 = vst [vmem:[#allocation7] sm:$0xff] %v67
    // Predicated region
    $region22: #{tpu_custom_call.1} parent=1 // pred_check
      _
    $region23: #{tpu_custom_call.1} parent=1 // pred_check_branch
      %70 = sbr.rel (0) target = $region25
    $region24: #{tpu_custom_call.1} parent=1 // pred_region
      %s72 = ssub.s32 128, 128
      %73 = vsyncadd [#allocation4], %s72
      %s75 = sshll.u32 [#allocation7], 4
      %s76 = int_to_ptr.vmem [resolvable:$true] %s75
      %78 = dma.vmem_to_hbm [thread:$0]  %s76, 128, %s2, [#allocation4]
    $region25: #{tpu_custom_call.1} parent=1 // pred_fallthru
      _
    // Predicated region
    $region26: #{tpu_custom_call.1} parent=1 // pred_check
      _
    $region27: #{tpu_custom_call.1} parent=1 // pred_check_branch
      %80 = sbr.rel (0) target = $region29
    $region28: #{tpu_custom_call.1} parent=1 // pred_region
      %81 = dma.done [#allocation4], 128
    $region29: #{tpu_custom_call.1} parent=1 // pred_fallthru
      _
    %82 = vsyncpa [#allocation3], 1
    %83 = vsyncpa [#allocation6], 1
    %84 = vsyncpa [#allocation4], 1

</llo_original>
